<compile_context>
chip_gen: v7x
topology: tpu7x:2x2x1
jax: 0.10.0
libtpu: 0.0.40
codegen_flags: <defaults>
</compile_context>

<pallas_src>
import math
from functools import partial

import jax
import jax.numpy as jnp
from jax.experimental import pallas as pl
from jax.experimental.pallas import tpu as pltpu

BN_EPS = 1e-5
STAGES = ((64, 3, 1), (128, 4, 2), (256, 6, 2), (512, 3, 2))
SPATIAL_K = 7
SP_PAD = SPATIAL_K // 2


def _ru(x, m):
    return (x + m - 1) // m * m


def _pick(dim, cands, full_cap):
    """Pick a tile size that divides `dim` (preferring big MXU-friendly tiles).

    Returns (tile, padded_dim).  Padding only happens in a fallback that the
    shapes of this network never trigger.
    """
    for c in cands:
        if c <= dim and dim % c == 0:
            return c, dim
    if dim <= full_cap:
        return dim, dim                      # single full-extent block
    pad = _ru(dim, cands[-1])
    return cands[-1], pad


# ---------------------------------------------------------------------------
# Pallas kernels
# ---------------------------------------------------------------------------
def _mm_kernel(a_ref, b_ref, s_ref, bi_ref, o_ref, acc_ref, *, act):
    """Tiled matmul with fused affine (folded BN / bias) epilogue."""
    @pl.when(pl.program_id(2) == 0)
    def _():
        acc_ref[...] = jnp.zeros_like(acc_ref)

    a = a_ref[...]
    b = b_ref[...]
    if a.dtype != jnp.bfloat16:
        a = a.astype(jnp.bfloat16)
    if b.dtype != jnp.bfloat16:
        b = b.astype(jnp.bfloat16)
    acc_ref[...] += jnp.dot(a, b, preferred_element_type=jnp.float32)

    @pl.when(pl.program_id(2) == pl.num_programs(2) - 1)
    def _():
        y = acc_ref[...] * s_ref[...] + bi_ref[...]
        if act == "relu":
            y = jnp.maximum(y, 0.0)
        elif act == "sigmoid":
            y = jax.nn.sigmoid(y)
        o_ref[...] = y.astype(o_ref.dtype)


def _mm_res_kernel(a_ref, b_ref, s_ref, bi_ref, r_ref, o_ref, acc_ref):
    """Tiled matmul with fused BN + residual add + ReLU epilogue."""
    @pl.when(pl.program_id(2) == 0)
    def _():
        acc_ref[...] = jnp.zeros_like(acc_ref)

    a = a_ref[...]
    b = b_ref[...]
    if a.dtype != jnp.bfloat16:
        a = a.astype(jnp.bfloat16)
    if b.dtype != jnp.bfloat16:
        b = b.astype(jnp.bfloat16)
    acc_ref[...] += jnp.dot(a, b, preferred_element_type=jnp.float32)

    @pl.when(pl.program_id(2) == pl.num_programs(2) - 1)
    def _():
        o_ref[...] = jnp.maximum(
            acc_ref[...] * s_ref[...] + bi_ref[...] + r_ref[...], 0.0
        ).astype(o_ref.dtype)


def _pool_avg_max_kernel(x_ref, avg_ref, max_ref):
    x = x_ref[...]
    avg_ref[...] = jnp.mean(x, axis=1, keepdims=True)
    max_ref[...] = jnp.max(x, axis=1, keepdims=True)


def _cbam_pool_kernel(x_ref, gc_ref, max_ref, mean_ref):
    # fused channel-gate multiply + channel max/mean pooling (no xc writeback)
    xc = x_ref[...] * gc_ref[...]
    max_ref[...] = jnp.max(xc, axis=-1, keepdims=True)
    mean_ref[...] = jnp.mean(xc, axis=-1, keepdims=True)


def _cbam_apply_kernel(x_ref, gc_ref, gs_ref, o_ref):
    # out = x * sigmoid(channel_att) * sigmoid(spatial_att); both gates are
    # already sigmoided (channel in XLA on a tiny (N,C); spatial inside the
    # spatial-conv matmul epilogue).
    o_ref[...] = x_ref[...] * gc_ref[...] * gs_ref[...]


def _max9_kernel(s0, s1, s2, s3, s4, s5, s6, s7, s8, o_ref):
    m = s0[...]
    for r in (s1, s2, s3, s4, s5, s6, s7, s8):
        m = jnp.maximum(m, r[...])
    o_ref[...] = m


# ---------------------------------------------------------------------------
# Pallas wrappers
# ---------------------------------------------------------------------------
def _whole_call(kernel, arrays, out_shapes):
    """Call a kernel once with full-array VMEM blocks (small tensors only)."""
    single = not isinstance(out_shapes, (tuple, list))
    outs = (out_shapes,) if single else tuple(out_shapes)

    def fullspec(shape):
        nd = len(shape)
        return pl.BlockSpec(shape, lambda i, _nd=nd: (0,) * _nd)

    out_specs = fullspec(outs[0].shape) if single else [fullspec(o.shape)
                                                        for o in outs]
    return pl.pallas_call(
        kernel,
        grid=(1,),
        in_specs=[fullspec(a.shape) for a in arrays],
        out_specs=out_specs,
        out_shape=out_shapes,
    )(*arrays)


@partial(jax.jit, static_argnames=("act",))
def _fused_mm(a, b, scale, bias, act=None, res=None):
    """out = epilogue(A @ B), epilogue = (acc*scale + bias) [+res] [act]."""
    M, K = a.shape
    _, N = b.shape
    tm, Mp = _pick(M, (256, 128, 64, 32, 16, 8), 256)
    tn, Np = _pick(N, (256, 128), 256)
    tk, Kp = _pick(K, (512, 256, 128), 2048)

    if Mp != M or Kp != K:
        a = jnp.pad(a, ((0, Mp - M), (0, Kp - K)))
    if Kp != K or Np != N:
        b = jnp.pad(b, ((0, Kp - K), (0, Np - N)))
    s2 = scale.reshape(1, N).astype(jnp.float32)
    b2 = bias.reshape(1, N).astype(jnp.float32)
    if Np != N:
        s2 = jnp.pad(s2, ((0, 0), (0, Np - N)))
        b2 = jnp.pad(b2, ((0, 0), (0, Np - N)))

    in_specs = [pl.BlockSpec((tm, tk), lambda i, j, k: (i, k)),
                pl.BlockSpec((tk, tn), lambda i, j, k: (k, j)),
                pl.BlockSpec((1, tn), lambda i, j, k: (0, j)),
                pl.BlockSpec((1, tn), lambda i, j, k: (0, j))]
    args = [a, b, s2, b2]
    if res is not None:
        r = res.astype(jnp.float32)
        if Mp != M or Np != N:
            r = jnp.pad(r, ((0, Mp - M), (0, Np - N)))
        in_specs.append(pl.BlockSpec((tm, tn), lambda i, j, k: (i, j)))
        args.append(r)
        kernel = _mm_res_kernel          # residual path is always BN+add+ReLU
    else:
        kernel = partial(_mm_kernel, act=act)

    out = pl.pallas_call(
        kernel,
        out_shape=jax.ShapeDtypeStruct((Mp, Np), jnp.float32),
        grid_spec=pltpu.PrefetchScalarGridSpec(
            num_scalar_prefetch=0,
            grid=(Mp // tm, Np // tn, Kp // tk),
            in_specs=in_specs,
            out_specs=pl.BlockSpec((tm, tn), lambda i, j, k: (i, j)),
            scratch_shapes=[pltpu.VMEM((tm, tn), jnp.float32)]),
        compiler_params=pltpu.CompilerParams(
            dimension_semantics=("parallel", "parallel", "arbitrary")),
    )(*args)
    if Mp != M or Np != N:
        out = out[:M, :N]
    return out


@jax.jit
def pool_avg_max(x3):
    n, _, c = x3.shape
    o = jax.ShapeDtypeStruct((n, 1, c), x3.dtype)
    return _whole_call(_pool_avg_max_kernel, [x3], (o, o))


@jax.jit
def cbam_pool(x3, gc):
    n, hw, _ = x3.shape
    o = jax.ShapeDtypeStruct((n, hw, 1), x3.dtype)
    return _whole_call(_cbam_pool_kernel, [x3, gc], (o, o))


@jax.jit
def cbam_apply(x3, gc, gs3):
    n, hw, c = x3.shape
    t = hw
    for cand in (512, 256, 128, 64, 32, 16, 8):
        if hw % cand == 0:
            t = cand
            break
    return pl.pallas_call(
        _cbam_apply_kernel,
        out_shape=jax.ShapeDtypeStruct((n, hw, c), x3.dtype),
        grid=(hw // t,),
        in_specs=[pl.BlockSpec((n, t, c), lambda i: (0, i, 0)),
                  pl.BlockSpec((n, 1, c), lambda i: (0, 0, 0)),
                  pl.BlockSpec((n, t, 1), lambda i: (0, i, 0))],
        out_specs=pl.BlockSpec((n, t, c), lambda i: (0, i, 0)),
        compiler_params=pltpu.CompilerParams(
            dimension_semantics=("parallel",)),
    )(x3, gc, gs3)


# ---------------------------------------------------------------------------
# Conv / pooling glue (im2col is plain JAX slicing; matmul+BN is Pallas)
# ---------------------------------------------------------------------------
def _im2col(x, kh, kw, stride, pad):
    n, h, w, c = x.shape
    xp = jnp.pad(x, ((0, 0), (pad, pad), (pad, pad), (0, 0)))
    oh = (h + 2 * pad - kh) // stride + 1
    ow = (w + 2 * pad - kw) // stride + 1
    cols = []
    for i in range(kh):
        for j in range(kw):
            cols.append(xp[:, i:i + stride * oh:stride,
                           j:j + stride * ow:stride, :])
    patches = jnp.stack(cols, axis=3)                # (N, OH, OW, kh*kw, C)
    return patches.reshape(n, oh, ow, kh * kw * c), oh, ow


@partial(jax.jit, static_argnames=("stride", "pad", "act"))
def conv_bn(x, w, stride, pad, scale, bias, act=None, res=None):
    """conv (im2col + fused MXU matmul) with BN/bias(+res)(+act) epilogue."""
    kh, kw, cin, cout = w.shape
    # bf16 activations: halves HBM traffic of the im2col patch tensor.
    patches, oh, ow = _im2col(x.astype(jnp.bfloat16), kh, kw, stride, pad)
    n = x.shape[0]
    a = patches.reshape(n * oh * ow, kh * kw * cin)
    r = None if res is None else res.reshape(n * oh * ow, cout)
    y = _fused_mm(a, w.reshape(kh * kw * cin, cout), scale, bias,
                  act=act, res=r)
    return y.reshape(n, oh, ow, cout)


@jax.jit
def maxpool_3x3_s2(x):
    n, h, w, c = x.shape
    xp = jnp.pad(x, ((0, 0), (1, 1), (1, 1), (0, 0)),
                 constant_values=float("-inf"))
    oh = (h - 1) // 2 + 1
    ow = (w - 1) // 2 + 1
    slabs = [xp[:, i:i + 2 * oh:2, j:j + 2 * ow:2, :].reshape(n * oh * ow, c)
             for i in range(3) for j in range(3)]
    out = _whole_call(_max9_kernel, slabs,
                      jax.ShapeDtypeStruct((n * oh * ow, c), x.dtype))
    return out.reshape(n, oh, ow, c)


# ---------------------------------------------------------------------------
# Model pieces
# ---------------------------------------------------------------------------
def _bn_fold(bn):
    scale = bn["gamma"] / jnp.sqrt(bn["var"] + BN_EPS)
    bias = bn["beta"] - bn["mean"] * scale
    return scale, bias


def basic_block(x, p, stride):
    identity = x
    s1, b1 = _bn_fold(p["bn1"])
    out = conv_bn(x, p["conv1_w"], stride=stride, pad=1,
                  scale=s1, bias=b1, act="relu")
    if "down_conv_w" in p:
        sd, bd = _bn_fold(p["down_bn"])
        identity = conv_bn(x, p["down_conv_w"], stride=stride, pad=0,
                           scale=sd, bias=bd, act=None)
    s2, b2 = _bn_fold(p["bn2"])
    return conv_bn(out, p["conv2_w"], stride=1, pad=1,
                   scale=s2, bias=b2, res=identity)


def cbam(x, p):
    n, h, w, c = x.shape
    hw = h * w
    x3 = x.reshape(n, hw, c)

    # --- channel gate: shared MLP on global avg+max pool (batched together) ---
    avg, mx = pool_avg_max(x3)                                  # (N,1,C) each
    v = jnp.concatenate([avg, mx], axis=0).reshape(2 * n, c)    # (2N, C)
    one1 = jnp.ones_like(p["fc1_b"])
    one2 = jnp.ones_like(p["fc2_b"])
    hdn = _fused_mm(v, p["fc1_w"], one1, p["fc1_b"], act="relu")
    z = _fused_mm(hdn, p["fc2_w"], one2, p["fc2_b"], act=None)  # (2N, C)
    gc = jax.nn.sigmoid(z[:n] + z[n:]).reshape(n, 1, c)         # tiny, XLA

    # --- spatial gate: channel max/mean of gated x -> 7x7 conv -> BN -> sigm ---
    cp_max, cp_mean = cbam_pool(x3, gc)                         # (N,HW,1) each
    sp_in = jnp.concatenate([cp_max, cp_mean], axis=-1).reshape(n, h, w, 2)
    ss, sb = _bn_fold(p["sp_bn"])
    gs = conv_bn(sp_in, p["sp_conv_w"], stride=1, pad=SP_PAD,
                 scale=ss, bias=sb, act="sigmoid")              # (N,H,W,1)

    # --- apply both gates in one pass over x ---
    out = cbam_apply(x3, gc, gs.reshape(n, hw, 1))
    return out.reshape(n, h, w, c)


def forward(params, x_nchw):
    x = jnp.transpose(x_nchw, (0, 2, 3, 1)).astype(jnp.float32)  # NCHW -> NHWC
    s, b = _bn_fold(params["bn1"])
    x = conv_bn(x, params["conv1_w"], stride=2, pad=3,
                scale=s, bias=b, act="relu")
    x = maxpool_3x3_s2(x)
    for si, stage in enumerate(params["stages"]):
        stride0 = STAGES[si][2]
        for bi, blk in enumerate(stage):
            stride = stride0 if bi == 0 else 1
            x = basic_block(x, blk, stride)
            x = cbam(x, blk["cbam"])
    n, h, w, c = x.shape
    avg, _ = pool_avg_max(x.reshape(n, h * w, c))     # adaptive avg pool (1,1)
    feat = avg.reshape(n, c)
    return _fused_mm(feat, params["fc_w"], jnp.ones_like(params["fc_b"]),
                     params["fc_b"], act=None)


# ---------------------------------------------------------------------------
# Deterministic parameter construction (synthetic; no checkpoint)
# ---------------------------------------------------------------------------
class KeyGen:
    def __init__(self, key):
        self.key = key

    def next(self):
        self.key, sub = jax.random.split(self.key)
        return sub


def _conv_w(kg, kh, kw, cin, cout):
    std = math.sqrt(2.0 / (kh * kw * cout))          # kaiming fan_out
    return jax.random.normal(kg.next(), (kh, kw, cin, cout), jnp.float32) * std


def _lin_w(kg, cin, cout):
    std = 1.0 / math.sqrt(cin)
    return jax.random.normal(kg.next(), (cin, cout), jnp.float32) * std


def _bn_p(c):
    return {"gamma": jnp.ones((c,), jnp.float32),
            "beta": jnp.zeros((c,), jnp.float32),
            "mean": jnp.zeros((c,), jnp.float32),
            "var": jnp.ones((c,), jnp.float32)}


def build_params(key, num_classes=10, reduction=16):
    kg = KeyGen(key)
    params = {"conv1_w": _conv_w(kg, 7, 7, 3, 64), "bn1": _bn_p(64)}
    stages = []
    inplanes = 64
    for planes, blocks, stride in STAGES:
        stage = []
        for bidx in range(blocks):
            s = stride if bidx == 0 else 1
            bp = {"conv1_w": _conv_w(kg, 3, 3, inplanes, planes),
                  "bn1": _bn_p(planes),
                  "conv2_w": _conv_w(kg, 3, 3, planes, planes),
                  "bn2": _bn_p(planes)}
            if s != 1 or inplanes != planes:
                bp["down_conv_w"] = _conv_w(kg, 1, 1, inplanes, planes)
                bp["down_bn"] = _bn_p(planes)
            inplanes = planes
            hdn = max(planes // reduction, 1)
            bp["cbam"] = {"fc1_w": _lin_w(kg, planes, hdn),
                          "fc1_b": jnp.zeros((hdn,), jnp.float32),
                          "fc2_w": _lin_w(kg, hdn, planes),
                          "fc2_b": jnp.zeros((planes,), jnp.float32),
                          "sp_conv_w": _conv_w(kg, SPATIAL_K, SPATIAL_K, 2, 1),
                          "sp_bn": _bn_p(1)}
            stage.append(bp)
        stages.append(stage)
    params["stages"] = stages
    params["fc_w"] = jax.random.normal(kg.next(), (512, num_classes),
                                       jnp.float32) * 0.01
    params["fc_b"] = jnp.zeros((num_classes,), jnp.float32)
    return params


if __name__ == "__main__":
    key = jax.random.PRNGKey(0)
    pkey, xkey = jax.random.split(key)
    params = build_params(pkey, num_classes=10)
    # small, ResNet-compatible input: NCHW like the PyTorch module
    x = jax.random.normal(xkey, (2, 3, 32, 32), jnp.float32)
    logits = forward(params, x)
    logits = jax.block_until_ready(logits)
    assert logits.shape == (2, 10)
    assert bool(jnp.all(jnp.isfinite(logits)))
    print("KERNEL_OK")
</pallas_src>

<mosaic_0001>
module attributes {stable_mosaic.version = 11 : i64} {
  func.func @_mm_kernel(%arg0: i32, %arg1: i32, %arg2: i32, %arg3: memref<256x147xbf16, #tpu.memory_space<vmem>>, %arg4: memref<147x64xf32, #tpu.memory_space<vmem>>, %arg5: memref<1x64xf32, #tpu.memory_space<vmem>>, %arg6: memref<1x64xf32, #tpu.memory_space<vmem>>, %arg7: memref<256x64xf32, #tpu.memory_space<vmem>>, %arg8: memref<256x64xf32, #tpu.memory_space<vmem>>) attributes {dimension_semantics = [#tpu.dimension_semantics<parallel>, #tpu.dimension_semantics<parallel>, #tpu.dimension_semantics<arbitrary>], iteration_bounds = array<i64: 2, 1, 1>, scalar_prefetch = 0 : i64, scratch_operands = 1 : i64, tpu.core_type = #tpu.core_type<tc>, window_params = [{transform_indices = @transform_0, window_bounds = array<i64: 256, 147>}, {transform_indices = @transform_1, window_bounds = array<i64: 147, 64>}, {transform_indices = @transform_2, window_bounds = array<i64: 1, 64>}, {transform_indices = @transform_3, window_bounds = array<i64: 1, 64>}, {transform_indices = @transform_4, window_bounds = array<i64: 256, 64>}]} {
    %c0_i32 = arith.constant 0 : i32
    %0 = arith.cmpi eq, %arg2, %c0_i32 : i32
    %1 = arith.extui %0 : i1 to i32
    %c0_i32_0 = arith.constant 0 : i32
    %2 = arith.cmpi ne, %1, %c0_i32_0 : i32
    scf.if %2 {
      %cst_10 = arith.constant 0.000000e+00 : f32
      %13 = vector.broadcast %cst_10 : f32 to vector<256x64xf32>
      %c0_11 = arith.constant 0 : index
      %c0_12 = arith.constant 0 : index
      %14 = vector.load %arg8[%c0_11, %c0_12] : memref<256x64xf32, #tpu.memory_space<vmem>>, vector<256x64xf32>
      tpu.vector_store %arg8[%c0_11, %c0_12], %13 {strides = array<i32>} : memref<256x64xf32, #tpu.memory_space<vmem>>, vector<256x64xf32>,
    } else {
    }
    %c0 = arith.constant 0 : index
    %c0_1 = arith.constant 0 : index
    %3 = vector.load %arg3[%c0, %c0_1] : memref<256x147xbf16, #tpu.memory_space<vmem>>, vector<256x147xbf16>
    %c0_2 = arith.constant 0 : index
    %c0_3 = arith.constant 0 : index
    %4 = vector.load %arg4[%c0_2, %c0_3] : memref<147x64xf32, #tpu.memory_space<vmem>>, vector<147x64xf32>
    %5 = arith.truncf %4 : vector<147x64xf32> to vector<147x64xbf16>
    %c0_4 = arith.constant 0 : index
    %c0_5 = arith.constant 0 : index
    %6 = vector.load %arg8[%c0_4, %c0_5] : memref<256x64xf32, #tpu.memory_space<vmem>>, vector<256x64xf32>
    %cst = arith.constant dense<0.000000e+00> : vector<256x64xf32>
    %7 = tpu.matmul %3, %5, %cst {dimension_numbers = #tpu.dot_dimension_numbers<[1], [0], [0], [1], [0, 0, 1, 1], [], []>} : vector<256x147xbf16>, vector<147x64xbf16>, vector<256x64xf32> -> vector<256x64xf32>
    %8 = arith.addf %6, %7 : vector<256x64xf32>
    %c0_6 = arith.constant 0 : index
    %c0_7 = arith.constant 0 : index
    %9 = vector.load %arg8[%c0_6, %c0_7] : memref<256x64xf32, #tpu.memory_space<vmem>>, vector<256x64xf32>
    tpu.vector_store %arg8[%c0_6, %c0_7], %8 {strides = array<i32>} : memref<256x64xf32, #tpu.memory_space<vmem>>, vector<256x64xf32>,
    %c0_i32_8 = arith.constant 0 : i32
    %10 = arith.cmpi eq, %arg2, %c0_i32_8 : i32
    %11 = arith.extui %10 : i1 to i32
    %c0_i32_9 = arith.constant 0 : i32
    %12 = arith.cmpi ne, %11, %c0_i32_9 : i32
    scf.if %12 {
      %c0_10 = arith.constant 0 : index
      %c0_11 = arith.constant 0 : index
      %13 = vector.load %arg8[%c0_10, %c0_11] : memref<256x64xf32, #tpu.memory_space<vmem>>, vector<256x64xf32>
      %c0_12 = arith.constant 0 : index
      %c0_13 = arith.constant 0 : index
      %14 = vector.load %arg5[%c0_12, %c0_13] : memref<1x64xf32, #tpu.memory_space<vmem>>, vector<1x64xf32>
      %15 = vector.broadcast %14 : vector<1x64xf32> to vector<256x64xf32>
      %16 = arith.mulf %13, %15 : vector<256x64xf32>
      %c0_14 = arith.constant 0 : index
      %c0_15 = arith.constant 0 : index
      %17 = vector.load %arg6[%c0_14, %c0_15] : memref<1x64xf32, #tpu.memory_space<vmem>>, vector<1x64xf32>
      %18 = vector.broadcast %17 : vector<1x64xf32> to vector<256x64xf32>
      %19 = arith.addf %16, %18 : vector<256x64xf32>
      %cst_16 = arith.constant 0.000000e+00 : f32
      %20 = vector.broadcast %cst_16 : f32 to vector<256x64xf32>
      %21 = arith.maximumf %19, %20 : vector<256x64xf32>
      %c0_17 = arith.constant 0 : index
      %c0_18 = arith.constant 0 : index
      %22 = vector.load %arg7[%c0_17, %c0_18] : memref<256x64xf32, #tpu.memory_space<vmem>>, vector<256x64xf32>
      tpu.vector_store %arg7[%c0_17, %c0_18], %21 {strides = array<i32>} : memref<256x64xf32, #tpu.memory_space<vmem>>, vector<256x64xf32>,
    } else {
    }
    return
  }
  func.func @transform_0(%arg0: i32, %arg1: i32, %arg2: i32) -> (i32, i32) {
    %c0_i32 = arith.constant 0 : i32
    return %arg0, %arg2 : i32, i32
  }
  func.func @transform_1(%arg0: i32, %arg1: i32, %arg2: i32) -> (i32, i32) {
    %c0_i32 = arith.constant 0 : i32
    return %arg2, %arg1 : i32, i32
  }
  func.func @transform_2(%arg0: i32, %arg1: i32, %arg2: i32) -> (i32, i32) {
    %c0_i32 = arith.constant 0 : i32
    %c0_i32_0 = arith.constant 0 : i32
    return %c0_i32, %arg1 : i32, i32
  }
  func.func @transform_3(%arg0: i32, %arg1: i32, %arg2: i32) -> (i32, i32) {
    %c0_i32 = arith.constant 0 : i32
    %c0_i32_0 = arith.constant 0 : i32
    return %c0_i32, %arg1 : i32, i32
  }
  func.func @transform_4(%arg0: i32, %arg1: i32, %arg2: i32) -> (i32, i32) {
    %c0_i32 = arith.constant 0 : i32
    return %arg0, %arg1 : i32, i32
  }
}

</mosaic_0001>

<llo_original>
// kernel: _fused_mm.1
$region0: #{_fused_mm.1}
  #allocation0 [shape = 'u32[]', space=smem, size = 0x4, offset = 0x4, fixed_abs, tag = 'smem constant byte address 0x4 - core index']
  #allocation1 [shape = 'u32[144,128]{1,0:T(1,128)}', space=vmem, size = 0x12000, scoped, tag = 'internal scratch']
  #allocation2 [shape = 'f32[256,64]{1,0:T(8,128)}', space=vmem, size = 0x20000, scoped, tag = 'scratch operand']
  %s0 = inlined_call_operand.vmem [shape: bf16[512,147], index: 0, kind: input, shape index: {}]
  %s1 = inlined_call_operand.vmem [shape: f32[147,64], index: 1, kind: input, shape index: {}]
  %s2 = inlined_call_operand.vmem [shape: f32[1,64], index: 2, kind: input, shape index: {}]
  %s3 = inlined_call_operand.vmem [shape: f32[1,64], index: 3, kind: input, shape index: {}]
  %s4 = inlined_call_operand.vmem [shape: f32[512,64], index: 4, kind: output, shape index: {}]
  %s5 = sld [smem:[#allocation0]]
  $region57: #{_fused_mm.1} parent=0
    _
  %s7 = ssub.s32 1, %s5
  %s8 = scalar_select 0, %s7, %s5
  loop: start=0, step=1, limit=4
  $region2: #{_fused_mm.1} parent=0 // loop_pre_header
    _
  $region3: #{_fused_mm.1} parent=0 // loop_header
    %s10 = sphi 0, %s14
    %p11 = scmp.ge.s32.totalorder %s10, 4
    %s17 = sphi 0, %s36
    %s18 = sphi 0, %s32
    %s19 = sphi 0, %s28
    %s20 = sphi 0, %s17
    %s21 = sphi 0, %s18
    %s22 = sphi 0, %s19
    %s23 = sphi 0, %s20
    %s24 = sphi 0, %s21
    %s25 = sphi 0, %s22
    %s41 = sphi 0, %s43
    %s44 = sphi 0, %s41
    %s45 = sphi 0, %s44
    %s61 = sphi 0, %s45
    %s69 = sphi 0, %s71
    %s72 = sphi 0, %s69
    %s73 = sphi 0, %s72
    %s89 = sphi 0, %s73
    %s95 = sphi 0, %s97
    %s98 = sphi 0, %s95
    %s99 = sphi 0, %s98
    %s115 = sphi 0, %s99
    %s121 = sphi 0, %s123
    %s124 = sphi 0, %s121
    %s125 = sphi 0, %s124
    %s141 = sphi 0, %s125
    %s149 = sphi 0, %s151
    %s152 = sphi 0, %s149
    %s153 = sphi 0, %s152
    %s169 = sphi 0, %s153
  $region4: #{_fused_mm.1} parent=0 // loop_header_branch
    %13 = sbr.rel (%p11) target = $region8
  $region5: #{_fused_mm.1} parent=0 // loop_body
    %s15 = ssub.s32 %s10, 1
    %s16 = ssub.s32 %s10, 2
    %s26 = sadd.s32 1, %s19
    %p27 = scmp.ge.s32.totalorder %s26, 1
    %s28 = scalar_select %p27, 0, %s26
    %s29 = sadd.s32 1, %s18
    %s30 = scalar_select %p27, %s29, %s18
    %p31 = scmp.ge.s32.totalorder %s30, 1
    %s32 = scalar_select %p31, 0, %s30
    %s33 = sadd.s32 1, %s17
    %s34 = scalar_select %p31, %s33, %s17
    %p35 = scmp.ge.s32.totalorder %s34, 2
    %s36 = scalar_select %p35, 0, %s34
    %s37 = ssub.s32 %s17, %s36
    %s38 = ssub.s32 %s19, %s28
    %s39 = sor.u32 %s37, %s38
    %p40 = scmp.eq.s32.totalorder %s39, 0
    %s42 = sadd.s32 %s41, 1
    %s43 = scalar_select %p40, %s41, %s42
    %p46 = pneg %p40
    %p47 = scmp.eq.s32.totalorder %s10, 1
    %p48 = por %p46, %p47
    %p49 = scmp.ne.s32.totalorder %s41, %s44
    %p50 = scmp.eq.s32.totalorder %s10, 0
    %p51 = por %p49, %p50
    %p52 = scmp.ne.s32.totalorder %s41, %s44
    %p53 = scmp.eq.s32.totalorder %s15, 1
    %p54 = por %p52, %p53
    %p55 = scmp.ne.s32.totalorder %s44, %s45
    %p56 = scmp.eq.s32.totalorder %s15, 0
    %p57 = por %p55, %p56
    %p58 = scmp.ne.s32.totalorder %s44, %s45
    %p59 = scmp.eq.s32.totalorder %s16, 1
    %p60 = por %p58, %p59
    %p62 = scmp.ne.s32.totalorder %s45, %s61
    %p63 = scmp.eq.s32.totalorder %s16, 0
    %p64 = por %p62, %p63
    %s65 = ssub.s32 %s19, %s28
    %s66 = ssub.s32 %s18, %s32
    %s67 = sor.u32 %s65, %s66
    %p68 = scmp.eq.s32.totalorder %s67, 0
    %s70 = sadd.s32 %s69, 1
    %s71 = scalar_select %p68, %s69, %s70
    %p74 = pneg %p68
    %p75 = scmp.eq.s32.totalorder %s10, 1
    %p76 = por %p74, %p75
    %p77 = scmp.ne.s32.totalorder %s69, %s72
    %p78 = scmp.eq.s32.totalorder %s10, 0
    %p79 = por %p77, %p78
    %p80 = scmp.ne.s32.totalorder %s69, %s72
    %p81 = scmp.eq.s32.totalorder %s15, 1
    %p82 = por %p80, %p81
    %p83 = scmp.ne.s32.totalorder %s72, %s73
    %p84 = scmp.eq.s32.totalorder %s15, 0
    %p85 = por %p83, %p84
    %p86 = scmp.ne.s32.totalorder %s72, %s73
    %p87 = scmp.eq.s32.totalorder %s16, 1
    %p88 = por %p86, %p87
    %p90 = scmp.ne.s32.totalorder %s73, %s89
    %p91 = scmp.eq.s32.totalorder %s16, 0
    %p92 = por %p90, %p91
    %s93 = ssub.s32 %s18, %s32
    %p94 = scmp.eq.s32.totalorder %s93, 0
    %s96 = sadd.s32 %s95, 1
    %s97 = scalar_select %p94, %s95, %s96
    %p100 = pneg %p94
    %p101 = scmp.eq.s32.totalorder %s10, 1
    %p102 = por %p100, %p101
    %p103 = scmp.ne.s32.totalorder %s95, %s98
    %p104 = scmp.eq.s32.totalorder %s10, 0
    %p105 = por %p103, %p104
    %p106 = scmp.ne.s32.totalorder %s95, %s98
    %p107 = scmp.eq.s32.totalorder %s15, 1
    %p108 = por %p106, %p107
    %p109 = scmp.ne.s32.totalorder %s98, %s99
    %p110 = scmp.eq.s32.totalorder %s15, 0
    %p111 = por %p109, %p110
    %p112 = scmp.ne.s32.totalorder %s98, %s99
    %p113 = scmp.eq.s32.totalorder %s16, 1
    %p114 = por %p112, %p113
    %p116 = scmp.ne.s32.totalorder %s99, %s115
    %p117 = scmp.eq.s32.totalorder %s16, 0
    %p118 = por %p116, %p117
    %s119 = ssub.s32 %s18, %s32
    %p120 = scmp.eq.s32.totalorder %s119, 0
    %s122 = sadd.s32 %s121, 1
    %s123 = scalar_select %p120, %s121, %s122
    %p126 = pneg %p120
    %p127 = scmp.eq.s32.totalorder %s10, 1
    %p128 = por %p126, %p127
    %p129 = scmp.ne.s32.totalorder %s121, %s124
    %p130 = scmp.eq.s32.totalorder %s10, 0
    %p131 = por %p129, %p130
    %p132 = scmp.ne.s32.totalorder %s121, %s124
    %p133 = scmp.eq.s32.totalorder %s15, 1
    %p134 = por %p132, %p133
    %p135 = scmp.ne.s32.totalorder %s124, %s125
    %p136 = scmp.eq.s32.totalorder %s15, 0
    %p137 = por %p135, %p136
    %p138 = scmp.ne.s32.totalorder %s124, %s125
    %p139 = scmp.eq.s32.totalorder %s16, 1
    %p140 = por %p138, %p139
    %p142 = scmp.ne.s32.totalorder %s125, %s141
    %p143 = scmp.eq.s32.totalorder %s16, 0
    %p144 = por %p142, %p143
    %s145 = ssub.s32 %s17, %s36
    %s146 = ssub.s32 %s18, %s32
    %s147 = sor.u32 %s145, %s146
    %p148 = scmp.eq.s32.totalorder %s147, 0
    %s150 = sadd.s32 %s149, 1
    %s151 = scalar_select %p148, %s149, %s150
    %p154 = pneg %p148
    %p155 = scmp.eq.s32.totalorder %s10, 1
    %p156 = por %p154, %p155
    %p157 = scmp.ne.s32.totalorder %s149, %s152
    %p158 = scmp.eq.s32.totalorder %s10, 0
    %p159 = por %p157, %p158
    %p160 = scmp.ne.s32.totalorder %s149, %s152
    %p161 = scmp.eq.s32.totalorder %s15, 1
    %p162 = por %p160, %p161
    %p163 = scmp.ne.s32.totalorder %s152, %s153
    %p164 = scmp.eq.s32.totalorder %s15, 0
    %p165 = por %p163, %p164
    %p166 = scmp.ne.s32.totalorder %s152, %s153
    %p167 = scmp.eq.s32.totalorder %s16, 1
    %p168 = por %p166, %p167
    %p170 = scmp.ne.s32.totalorder %s153, %s169
    %p171 = scmp.eq.s32.totalorder %s16, 0
    %p172 = por %p170, %p171
    %p173 = scmp.le.s32.totalorder 1, %s10
    %p174 = scmp.lt.s32.totalorder %s10, 3
    %p175 = pnand %p173, %p174
    %p176 = pneg %p175
    // Predicated region
    $region9: #{_fused_mm.1} parent=5 // pred_check
      _
    $region10: #{_fused_mm.1} parent=5 // pred_check_branch
      %178 = sbr.rel (%p175) target = $region12
    $region11: #{_fused_mm.1} parent=5 // pred_region
      %s179 = ssub.s32 %s10, 1
      // Predicated region
      $region13: #{_fused_mm.1} parent=11 // pred_check
        %p180 = pneg %p85
      $region14: #{_fused_mm.1} parent=11 // pred_check_branch
        %182 = sbr.rel (%p180) target = $region16
      $region15: #{_fused_mm.1} parent=11 // pred_region
        %s183 = smul.u32 19, %s22
        %p184 = scmp.lt.s32.totalorder %s183, 18
        %s185 = scalar_select %p184, %s183, 18
        %p186 = scmp.lt.s32.totalorder %s21, 0
        %s187 = scalar_select %p186, %s21, 0
        %s188 = sadd.s32 %s187, %s185
        %s189 = smul.addr %s188, 8
        %s190 = scalar_lea.vmem %s1, %s189
        %s191 = smul.u32 19, %s22
      $region16: #{_fused_mm.1} parent=11 // pred_fallthru
        _
      // Predicated region
      $region17: #{_fused_mm.1} parent=11 // pred_check
        %p192 = pneg %p111
      $region18: #{_fused_mm.1} parent=11 // pred_check_branch
        %194 = sbr.rel (%p192) target = $region20
      $region19: #{_fused_mm.1} parent=11 // pred_region
        %p195 = scmp.lt.s32.totalorder %s21, 0
        %s196 = scalar_select %p195, %s21, 0
        %s197 = scalar_lea.vmem %s2, %s196
      $region20: #{_fused_mm.1} parent=11 // pred_fallthru
        _
      // Predicated region
      $region21: #{_fused_mm.1} parent=11 // pred_check
        %p198 = pneg %p137
      $region22: #{_fused_mm.1} parent=11 // pred_check_branch
        %200 = sbr.rel (%p198) target = $region24
      $region23: #{_fused_mm.1} parent=11 // pred_region
        %p201 = scmp.lt.s32.totalorder %s21, 0
        %s202 = scalar_select %p201, %s21, 0
        %s203 = scalar_lea.vmem %s3, %s202
      $region24: #{_fused_mm.1} parent=11 // pred_fallthru
        _
    $region12: #{_fused_mm.1} parent=5 // pred_fallthru
      _
    %p204 = scmp.lt.s32.totalorder %s10, 2
    // Predicated region
    $region25: #{_fused_mm.1} parent=5 // pred_check
      %p205 = pneg %p204
    $region26: #{_fused_mm.1} parent=5 // pred_check_branch
      %207 = sbr.rel (%p205) target = $region28
    $region27: #{_fused_mm.1} parent=5 // pred_region
      // Predicated region
      $region29: #{_fused_mm.1} parent=27 // pred_check
        %p208 = pneg %p51
      $region30: #{_fused_mm.1} parent=27 // pred_check_branch
        %210 = sbr.rel (%p208) target = $region32
      $region31: #{_fused_mm.1} parent=27 // pred_region
        %s211 = smul.u32 32, %s17
        %s212 = smul.u32 2, %s19
        %p213 = scmp.lt.s32.totalorder %s211, 63
        %s214 = scalar_select %p213, %s211, 63
        %p215 = scmp.lt.s32.totalorder %s212, 1
        %s216 = scalar_select %p215, %s212, 1
        %s217 = smul.addr %s214, 2
        %s218 = sadd.s32 %s216, %s217
        %s219 = smul.addr %s218, 4
        %s220 = scalar_lea.vmem %s0, %s219
        %s221 = smul.u32 32, %s17
        %s222 = smul.u32 2, %s19
      $region32: #{_fused_mm.1} parent=27 // pred_fallthru
        _
    $region28: #{_fused_mm.1} parent=5 // pred_fallthru
      _
    %p223 = scmp.le.s32.totalorder 1, %s10
    %p224 = scmp.lt.s32.totalorder %s10, 3
    %p225 = pnand %p223, %p224
    %p226 = pneg %p225
    // Predicated region
    $region33: #{_fused_mm.1} parent=5 // pred_check
      _
    $region34: #{_fused_mm.1} parent=5 // pred_check_branch
      %228 = sbr.rel (%p225) target = $region36
    $region35: #{_fused_mm.1} parent=5 // pred_region
      %s229 = ssub.s32 %s10, 1
      %s230 = smul.u32 32, %s20
      %s231 = smul.u32 2, %s22
      %p232 = scmp.lt.s32.totalorder %s230, 63
      %s233 = scalar_select %p232, %s230, 63
      %p234 = scmp.lt.s32.totalorder %s231, 1
      %s235 = scalar_select %p234, %s231, 1
      %s236 = smul.addr %s233, 2
      %s237 = sadd.s32 %s235, %s236
      %s238 = smul.addr %s237, 4
      %s239 = scalar_lea.vmem %s0, %s238
      %p240 = pneg %p57
      %p241 = pneg %p54
      %s242 = smul.u32 19, %s22
      %p243 = scmp.lt.s32.totalorder %s242, 18
      %s244 = scalar_select %p243, %s242, 18
      %p245 = scmp.lt.s32.totalorder %s21, 0
      %s246 = scalar_select %p245, %s21, 0
      %s247 = sadd.s32 %s246, %s244
      %s248 = smul.addr %s247, 8
      %s249 = scalar_lea.vmem %s1, %s248
      %p250 = pneg %p85
      %p251 = pneg %p82
      %p252 = scmp.lt.s32.totalorder %s21, 0
      %s253 = scalar_select %p252, %s21, 0
      %s254 = scalar_lea.vmem %s2, %s253
      %p255 = pneg %p111
      %p256 = pneg %p108
      %p257 = scmp.lt.s32.totalorder %s21, 0
      %s258 = scalar_select %p257, %s21, 0
      %s259 = scalar_lea.vmem %s3, %s258
      %p260 = pneg %p137
      %p261 = pneg %p134
      %p262 = pneg %p165
      %p263 = pneg %p162
      %s264 = smul.u32 32, %s20
      %p265 = scmp.lt.s32.totalorder %s264, 63
      %s266 = scalar_select %p265, %s264, 63
      %p267 = scmp.lt.s32.totalorder %s21, 0
      %s268 = scalar_select %p267, %s21, 0
      %s269 = sadd.s32 %s268, %s266
      %s270 = smul.addr %s269, 8
      %s271 = scalar_lea.vmem %s4, %s270
      %s272 = smul.u32 32, %s20
      %s273 = smul.u32 2, %s22
      %p274 = scmp.lt.s32.totalorder %s272, 63
      %s275 = scalar_select %p274, %s272, 63
      %p276 = scmp.lt.s32.totalorder %s273, 1
      %s277 = scalar_select %p276, %s273, 1
      %s278 = smul.addr %s275, 2
      %s279 = sadd.s32 %s277, %s278
      %s280 = smul.addr %s279, 4
      %s281 = scalar_lea.vmem %s0, %s280
      %s282 = smul.u32 32, %s20
      %s283 = smul.u32 2, %s22
      %s284 = smul.u32 19, %s22
      %p285 = scmp.lt.s32.totalorder %s284, 18
      %s286 = scalar_select %p285, %s284, 18
      %p287 = scmp.lt.s32.totalorder %s21, 0
      %s288 = scalar_select %p287, %s21, 0
      %s289 = sadd.s32 %s288, %s286
      %s290 = smul.addr %s289, 8
      %s291 = scalar_lea.vmem %s1, %s290
      %s292 = smul.u32 19, %s22
      %p293 = scmp.lt.s32.totalorder %s21, 0
      %s294 = scalar_select %p293, %s21, 0
      %s295 = scalar_lea.vmem %s2, %s294
      %p296 = scmp.lt.s32.totalorder %s21, 0
      %s297 = scalar_select %p296, %s21, 0
      %s298 = scalar_lea.vmem %s3, %s297
      %s299 = smul.u32 32, %s20
      %p300 = scmp.lt.s32.totalorder %s299, 63
      %s301 = scalar_select %p300, %s299, 63
      %p302 = scmp.lt.s32.totalorder %s21, 0
      %s303 = scalar_select %p302, %s21, 0
      %s304 = sadd.s32 %s303, %s301
      %s305 = smul.addr %s304, 8
      %s306 = scalar_lea.vmem %s4, %s305
      %s307 = smul.u32 32, %s20
      %p309 = scmp.eq.s32.totalorder %s22, 0
      // Predicated region
      $region37: #{_fused_mm.1} parent=35 // pred_check
        %p310 = pneg %p309
      $region38: #{_fused_mm.1} parent=35 // pred_check_branch
        %312 = sbr.rel (%p310) target = $region40
      $region39: #{_fused_mm.1} parent=35 // pred_region
        %vm313 = vcmask 523264
        %314 = vst.msk [vmem:[#allocation2] sm:$0xff] %vm313, 0.0
        %315 = vst.msk [vmem:[#allocation2 + $0x8] sm:$0xff] %vm313, 0.0
        %316 = vst.msk [vmem:[#allocation2 + $0x10] sm:$0xff] %vm313, 0.0
        %317 = vst.msk [vmem:[#allocation2 + $0x18] sm:$0xff] %vm313, 0.0
        %318 = vst.msk [vmem:[#allocation2 + $0x20] sm:$0xff] %vm313, 0.0
        %319 = vst.msk [vmem:[#allocation2 + $0x28] sm:$0xff] %vm313, 0.0
        %320 = vst.msk [vmem:[#allocation2 + $0x30] sm:$0xff] %vm313, 0.0
        %321 = vst.msk [vmem:[#allocation2 + $0x38] sm:$0xff] %vm313, 0.0
        %322 = vst.msk [vmem:[#allocation2 + $0x40] sm:$0xff] %vm313, 0.0
        %323 = vst.msk [vmem:[#allocation2 + $0x48] sm:$0xff] %vm313, 0.0
        %324 = vst.msk [vmem:[#allocation2 + $0x50] sm:$0xff] %vm313, 0.0
        %325 = vst.msk [vmem:[#allocation2 + $0x58] sm:$0xff] %vm313, 0.0
        %326 = vst.msk [vmem:[#allocation2 + $0x60] sm:$0xff] %vm313, 0.0
        %327 = vst.msk [vmem:[#allocation2 + $0x68] sm:$0xff] %vm313, 0.0
        %328 = vst.msk [vmem:[#allocation2 + $0x70] sm:$0xff] %vm313, 0.0
        %329 = vst.msk [vmem:[#allocation2 + $0x78] sm:$0xff] %vm313, 0.0
        %330 = vst.msk [vmem:[#allocation2 + $0x80] sm:$0xff] %vm313, 0.0
        %331 = vst.msk [vmem:[#allocation2 + $0x88] sm:$0xff] %vm313, 0.0
        %332 = vst.msk [vmem:[#allocation2 + $0x90] sm:$0xff] %vm313, 0.0
        %333 = vst.msk [vmem:[#allocation2 + $0x98] sm:$0xff] %vm313, 0.0
        %334 = vst.msk [vmem:[#allocation2 + $0xa0] sm:$0xff] %vm313, 0.0
        %335 = vst.msk [vmem:[#allocation2 + $0xa8] sm:$0xff] %vm313, 0.0
        %336 = vst.msk [vmem:[#allocation2 + $0xb0] sm:$0xff] %vm313, 0.0
        %337 = vst.msk [vmem:[#allocation2 + $0xb8] sm:$0xff] %vm313, 0.0
        %338 = vst.msk [vmem:[#allocation2 + $0xc0] sm:$0xff] %vm313, 0.0
        %339 = vst.msk [vmem:[#allocation2 + $0xc8] sm:$0xff] %vm313, 0.0
        %340 = vst.msk [vmem:[#allocation2 + $0xd0] sm:$0xff] %vm313, 0.0
        %341 = vst.msk [vmem:[#allocation2 + $0xd8] sm:$0xff] %vm313, 0.0
        %342 = vst.msk [vmem:[#allocation2 + $0xe0] sm:$0xff] %vm313, 0.0
        %343 = vst.msk [vmem:[#allocation2 + $0xe8] sm:$0xff] %vm313, 0.0
        %344 = vst.msk [vmem:[#allocation2 + $0xf0] sm:$0xff] %vm313, 0.0
        %345 = vst.msk [vmem:[#allocation2 + $0xf8] sm:$0xff] %vm313, 0.0
      $region40: #{_fused_mm.1} parent=35 // pred_fallthru
        _
      %v346 = vld [vmem:[%s281] sm:$0xff]
      %v347 = vld [vmem:[%s281 + $0x8] sm:$0xff]
      %v348 = vld [vmem:[%s281 + $0x10] sm:$0xff]
      %v349 = vld [vmem:[%s281 + $0x18] sm:$0xff]
      %v350 = vld [vmem:[%s281 + $0x20] sm:$0xff]
      %v351 = vld [vmem:[%s281 + $0x28] sm:$0xff]
      %v352 = vld [vmem:[%s281 + $0x30] sm:$0xff]
      %v353 = vld [vmem:[%s281 + $0x38] sm:$0xff]
      %v354 = vld [vmem:[%s281 + $0x40] sm:$0xff]
      %v355 = vld [vmem:[%s281 + $0x48] sm:$0xff]
      %v356 = vld [vmem:[%s281 + $0x50] sm:$0xff]
      %v357 = vld [vmem:[%s281 + $0x58] sm:$0xff]
      %v358 = vld [vmem:[%s281 + $0x60] sm:$0xff]
      %v359 = vld [vmem:[%s281 + $0x68] sm:$0xff]
      %v360 = vld [vmem:[%s281 + $0x70] sm:$0xff]
      %v361 = vld [vmem:[%s281 + $0x78] sm:$0xff]
      %v362 = vld [vmem:[%s281 + $0x80] sm:$0xff]
      %v363 = vld [vmem:[%s281 + $0x88] sm:$0xff]
      %v364 = vld [vmem:[%s281 + $0x90] sm:$0xff]
      %v365 = vld [vmem:[%s281 + $0x98] sm:$0xff]
      %v366 = vld [vmem:[%s281 + $0xa0] sm:$0xff]
      %v367 = vld [vmem:[%s281 + $0xa8] sm:$0xff]
      %v368 = vld [vmem:[%s281 + $0xb0] sm:$0xff]
      %v369 = vld [vmem:[%s281 + $0xb8] sm:$0xff]
      %v370 = vld [vmem:[%s281 + $0xc0] sm:$0xff]
      %v371 = vld [vmem:[%s281 + $0xc8] sm:$0xff]
      %v372 = vld [vmem:[%s281 + $0xd0] sm:$0xff]
      %v373 = vld [vmem:[%s281 + $0xd8] sm:$0xff]
      %v374 = vld [vmem:[%s281 + $0xe0] sm:$0xff]
      %v375 = vld [vmem:[%s281 + $0xe8] sm:$0xff]
      %v376 = vld [vmem:[%s281 + $0xf0] sm:$0xff]
      %v377 = vld [vmem:[%s281 + $0xf8] sm:$0xff]
      %v378 = vld [vmem:[%s291] sm:$0xff]
      %v379 = vld [vmem:[%s291 + $0x8] sm:$0xff]
      %v380 = vld [vmem:[%s291 + $0x10] sm:$0xff]
      %v381 = vld [vmem:[%s291 + $0x18] sm:$0xff]
      %v382 = vld [vmem:[%s291 + $0x20] sm:$0xff]
      %v383 = vld [vmem:[%s291 + $0x28] sm:$0xff]
      %v384 = vld [vmem:[%s291 + $0x30] sm:$0xff]
      %v385 = vld [vmem:[%s291 + $0x38] sm:$0xff]
      %v386 = vld [vmem:[%s291 + $0x40] sm:$0xff]
      %v387 = vld [vmem:[%s291 + $0x48] sm:$0xff]
      %v388 = vld [vmem:[%s291 + $0x50] sm:$0xff]
      %v389 = vld [vmem:[%s291 + $0x58] sm:$0xff]
      %v390 = vld [vmem:[%s291 + $0x60] sm:$0xff]
      %v391 = vld [vmem:[%s291 + $0x68] sm:$0xff]
      %v392 = vld [vmem:[%s291 + $0x70] sm:$0xff]
      %v393 = vld [vmem:[%s291 + $0x78] sm:$0xff]
      %v394 = vld [vmem:[%s291 + $0x80] sm:$0xff]
      %v395 = vld [vmem:[%s291 + $0x88] sm:$0xff]
      %v396 = vld [vmem:[%s291 + $0x90] sm:$0x7]
      %v397 = vpack.c.bf16 %v379, %v378
      %v398 = vpack.c.bf16 %v381, %v380
      %v399 = vpack.c.bf16 %v383, %v382
      %v400 = vpack.c.bf16 %v385, %v384
      %v401 = vpack.c.bf16 %v387, %v386
      %v402 = vpack.c.bf16 %v389, %v388
      %v403 = vpack.c.bf16 %v391, %v390
      %v404 = vpack.c.bf16 %v393, %v392
      %v405 = vpack.c.bf16 %v395, %v394
      %v406 = vpack.c.bf16 %v396, %v396
      %v407 = vld [vmem:[#allocation2] sm:$0xff]
      %v408 = vld [vmem:[#allocation2 + $0x8] sm:$0xff]
      %v409 = vld [vmem:[#allocation2 + $0x10] sm:$0xff]
      %v410 = vld [vmem:[#allocation2 + $0x18] sm:$0xff]
      %v411 = vld [vmem:[#allocation2 + $0x20] sm:$0xff]
      %v412 = vld [vmem:[#allocation2 + $0x28] sm:$0xff]
      %v413 = vld [vmem:[#allocation2 + $0x30] sm:$0xff]
      %v414 = vld [vmem:[#allocation2 + $0x38] sm:$0xff]
      %v415 = vld [vmem:[#allocation2 + $0x40] sm:$0xff]
      %v416 = vld [vmem:[#allocation2 + $0x48] sm:$0xff]
      %v417 = vld [vmem:[#allocation2 + $0x50] sm:$0xff]
      %v418 = vld [vmem:[#allocation2 + $0x58] sm:$0xff]
      %v419 = vld [vmem:[#allocation2 + $0x60] sm:$0xff]
      %v420 = vld [vmem:[#allocation2 + $0x68] sm:$0xff]
      %v421 = vld [vmem:[#allocation2 + $0x70] sm:$0xff]
      %v422 = vld [vmem:[#allocation2 + $0x78] sm:$0xff]
      %v423 = vld [vmem:[#allocation2 + $0x80] sm:$0xff]
      %v424 = vld [vmem:[#allocation2 + $0x88] sm:$0xff]
      %v425 = vld [vmem:[#allocation2 + $0x90] sm:$0xff]
      %v426 = vld [vmem:[#allocation2 + $0x98] sm:$0xff]
      %v427 = vld [vmem:[#allocation2 + $0xa0] sm:$0xff]
      %v428 = vld [vmem:[#allocation2 + $0xa8] sm:$0xff]
      %v429 = vld [vmem:[#allocation2 + $0xb0] sm:$0xff]
      %v430 = vld [vmem:[#allocation2 + $0xb8] sm:$0xff]
      %v431 = vld [vmem:[#allocation2 + $0xc0] sm:$0xff]
      %v432 = vld [vmem:[#allocation2 + $0xc8] sm:$0xff]
      %v433 = vld [vmem:[#allocation2 + $0xd0] sm:$0xff]
      %v434 = vld [vmem:[#allocation2 + $0xd8] sm:$0xff]
      %v435 = vld [vmem:[#allocation2 + $0xe0] sm:$0xff]
      %v436 = vld [vmem:[#allocation2 + $0xe8] sm:$0xff]
      %v437 = vld [vmem:[#allocation2 + $0xf0] sm:$0xff]
      %v438 = vld [vmem:[#allocation2 + $0xf8] sm:$0xff]
      %v471 = vunpack.c.l.b16 %v346
      %v472 = vunpack.c.h.b16 %v346
      %v473 = vunpack.c.l.b16 %v347
      %v474 = vunpack.c.h.b16 %v347
      %v475 = vunpack.c.l.b16 %v348
      %v476 = vunpack.c.h.b16 %v348
      %v477 = vunpack.c.l.b16 %v349
      %v478 = vunpack.c.h.b16 %v349
      %v479 = vunpack.c.l.b16 %v350
      %v480 = vunpack.c.h.b16 %v350
      %v481 = vunpack.c.l.b16 %v351
      %v482 = vunpack.c.h.b16 %v351
      %v483 = vunpack.c.l.b16 %v352
      %v484 = vunpack.c.h.b16 %v352
      %v485 = vunpack.c.l.b16 %v353
      %v486 = vunpack.c.h.b16 %v353
      %v487 = vunpack.c.l.b16 %v354
      %v488 = vunpack.c.h.b16 %v354
      %v489 = vunpack.c.l.b16 %v355
      %v490 = vunpack.c.h.b16 %v355
      %v491 = vunpack.c.l.b16 %v356
      %v492 = vunpack.c.h.b16 %v356
      %v493 = vunpack.c.l.b16 %v357
      %v494 = vunpack.c.h.b16 %v357
      %v495 = vunpack.c.l.b16 %v358
      %v496 = vunpack.c.h.b16 %v358
      %v497 = vunpack.c.l.b16 %v359
      %v498 = vunpack.c.h.b16 %v359
      %v499 = vunpack.c.l.b16 %v360
      %v500 = vunpack.c.h.b16 %v360
      %v501 = vunpack.c.l.b16 %v361
      %v502 = vunpack.c.h.b16 %v361
      %v503 = vunpack.c.l.b16 %v362
      %v504 = vunpack.c.h.b16 %v362
      %v505 = vunpack.c.l.b16 %v363
      %v506 = vunpack.c.h.b16 %v363
      %v507 = vunpack.c.l.b16 %v364
      %v508 = vunpack.c.h.b16 %v364
      %v509 = vunpack.c.l.b16 %v365
      %v510 = vunpack.c.h.b16 %v365
      %v511 = vunpack.c.l.b16 %v366
      %v512 = vunpack.c.h.b16 %v366
      %v513 = vunpack.c.l.b16 %v367
      %v514 = vunpack.c.h.b16 %v367
      %v515 = vunpack.c.l.b16 %v368
      %v516 = vunpack.c.h.b16 %v368
      %v517 = vunpack.c.l.b16 %v369
      %v518 = vunpack.c.h.b16 %v369
      %v519 = vunpack.c.l.b16 %v370
      %v520 = vunpack.c.h.b16 %v370
      %v521 = vunpack.c.l.b16 %v371
      %v522 = vunpack.c.h.b16 %v371
      %v523 = vunpack.c.l.b16 %v372
      %v524 = vunpack.c.h.b16 %v372
      %v525 = vunpack.c.l.b16 %v373
      %v526 = vunpack.c.h.b16 %v373
      %v527 = vunpack.c.l.b16 %v374
      %v528 = vunpack.c.h.b16 %v374
      %v529 = vunpack.c.l.b16 %v375
      %v530 = vunpack.c.h.b16 %v375
      %v531 = vunpack.c.l.b16 %v376
      %v532 = vunpack.c.h.b16 %v376
      %v533 = vunpack.c.l.b16 %v377
      %v534 = vunpack.c.h.b16 %v377
      %v535 = vpack.c.b16 %v473, %v471
      %v536 = vpack.c.b16 %v474, %v472
      %v537 = vpack.c.b16 %v477, %v475
      %v538 = vpack.c.b16 %v478, %v476
      %v539 = vpack.c.b16 %v481, %v479
      %v540 = vpack.c.b16 %v482, %v480
      %v541 = vpack.c.b16 %v485, %v483
      %v542 = vpack.c.b16 %v486, %v484
      %v543 = vpack.c.b16 %v489, %v487
      %v544 = vpack.c.b16 %v490, %v488
      %v545 = vpack.c.b16 %v493, %v491
      %v546 = vpack.c.b16 %v494, %v492
      %v547 = vpack.c.b16 %v497, %v495
      %v548 = vpack.c.b16 %v498, %v496
      %v549 = vpack.c.b16 %v501, %v499
      %v550 = vpack.c.b16 %v502, %v500
      %v551 = vpack.c.b16 %v505, %v503
      %v552 = vpack.c.b16 %v506, %v504
      %v553 = vpack.c.b16 %v509, %v507
      %v554 = vpack.c.b16 %v510, %v508
      %v555 = vpack.c.b16 %v513, %v511
      %v556 = vpack.c.b16 %v514, %v512
      %v557 = vpack.c.b16 %v517, %v515
      %v558 = vpack.c.b16 %v518, %v516
      %v559 = vpack.c.b16 %v521, %v519
      %v560 = vpack.c.b16 %v522, %v520
      %v561 = vpack.c.b16 %v525, %v523
      %v562 = vpack.c.b16 %v526, %v524
      %v563 = vpack.c.b16 %v529, %v527
      %v564 = vpack.c.b16 %v530, %v528
      %v565 = vpack.c.b16 %v533, %v531
      %v566 = vpack.c.b16 %v534, %v532
      %vm583 = vcmask 154624
      %v585 = vsel %vm583, %v536, 0
      %v588 = vsel %vm583, %v538, 0
      %v591 = vsel %vm583, %v540, 0
      %v594 = vsel %vm583, %v542, 0
      %v597 = vsel %vm583, %v544, 0
      %v600 = vsel %vm583, %v546, 0
      %v603 = vsel %vm583, %v548, 0
      %v606 = vsel %vm583, %v550, 0
      %v609 = vsel %vm583, %v552, 0
      %v612 = vsel %vm583, %v554, 0
      %v615 = vsel %vm583, %v556, 0
      %v618 = vsel %vm583, %v558, 0
      %v621 = vsel %vm583, %v560, 0
      %v624 = vsel %vm583, %v562, 0
      %v627 = vsel %vm583, %v564, 0
      %v630 = vsel %vm583, %v566, 0
      %vm632 = vcmask 1040384
      %vm633 = vcmask 1041408
      %v634 = vsel %vm632, 4294967295, 65535
      %v635 = vsel %vm633, %v634, 0
      %v637 = vand.u32 %v406, %v635
      %639 = vmatprep.subr.bf16.mxu0 0
      %640 = vmatpush1.bf16.msra.mxu0 %v397
      %641 = vmatprep.subr.bf16.mxu0 0
      %642 = vmatpush1.bf16.msra.mxu0 %v398
      %643 = vmatprep.subr.bf16.mxu0 0
      %644 = vmatpush1.bf16.msra.mxu0 %v399
      %645 = vmatprep.subr.bf16.mxu0 0
      %646 = vmatpush1.bf16.msra.mxu0 %v400
      %647 = vmatprep.subr.bf16.mxu0 0
      %648 = vmatpush1.bf16.msra.mxu0 %v401
      %649 = vmatprep.subr.bf16.mxu0 0
      %650 = vmatpush1.bf16.msra.mxu0 %v402
      %651 = vmatprep.subr.bf16.mxu0 0
      %652 = vmatpush1.bf16.msra.mxu0 %v403
      %653 = vmatprep.subr.bf16.mxu0 0
      %654 = vmatpush1.bf16.msra.mxu0 %v404
      %655 = vmatprep.subr.bf16.mxu0 0
      %656 = vmatpush1.bf16.msra.mxu0 %v405
      %657 = vmatprep.subr.bf16.mxu0 0
      %658 = vmatpush1.bf16.msra.mxu0 %v637
      %659 = vmatprep.subr.bf16.mxu0 0
      %660 = vmatpush1.bf16.msra.mxu0 0
      %661 = vmatprep.subr.bf16.mxu0 0
      %662 = vmatpush1.bf16.msra.mxu0 0
      %663 = vmatprep.subr.bf16.mxu0 0
      %664 = vmatpush1.bf16.msra.mxu0 0
      %665 = vmatprep.subr.bf16.mxu0 0
      %666 = vmatpush1.bf16.msra.mxu0 0
      %667 = vmatprep.subr.bf16.mxu0 0
      %668 = vmatpush1.bf16.msra.mxu0 0
      %669 = vmatprep.subr.bf16.mxu0 0
      %670 = vmatpush1.bf16.msra.mxu0 0
      %671 = vmatprep.mubr.bf16.mxu0 %v585
      %672 = vmatmul.mubr.bf16.gmra.mrb[0].mxu0 %v535
      %v673 = vpop.f32.mrb[0].mxu0
      %v674 = vadd.f32 0.0, %v673
      %v675 = vpop.f32.mrb[0].mxu0
      %v676 = vpop.f32.mrb[0].mxu0
      %v677 = vadd.f32 0.0, %v676
      %v678 = vpop.f32.mrb[0].mxu0
      %679 = vmatprep.mubr.bf16.mxu0 %v588
      %680 = vmatmul.mubr.bf16.gmra.mrb[0].mxu0 %v537
      %v681 = vpop.f32.mrb[0].mxu0
      %v682 = vadd.f32 0.0, %v681
      %v683 = vpop.f32.mrb[0].mxu0
      %v684 = vpop.f32.mrb[0].mxu0
      %v685 = vadd.f32 0.0, %v684
      %v686 = vpop.f32.mrb[0].mxu0
      %687 = vmatprep.mubr.bf16.mxu0 %v591
      %688 = vmatmul.mubr.bf16.gmra.mrb[0].mxu0 %v539
      %v689 = vpop.f32.mrb[0].mxu0
      %v690 = vadd.f32 0.0, %v689
      %v691 = vpop.f32.mrb[0].mxu0
      %v692 = vpop.f32.mrb[0].mxu0
      %v693 = vadd.f32 0.0, %v692
      %v694 = vpop.f32.mrb[0].mxu0
      %695 = vmatprep.mubr.bf16.mxu0 %v594
      %696 = vmatmul.mubr.bf16.gmra.mrb[0].mxu0 %v541
      %v697 = vpop.f32.mrb[0].mxu0
      %v698 = vadd.f32 0.0, %v697
      %v699 = vpop.f32.mrb[0].mxu0
      %v700 = vpop.f32.mrb[0].mxu0
      %v701 = vadd.f32 0.0, %v700
      %v702 = vpop.f32.mrb[0].mxu0
      %703 = vmatprep.mubr.bf16.mxu0 %v597
      %704 = vmatmul.mubr.bf16.gmra.mrb[0].mxu0 %v543
      %v705 = vpop.f32.mrb[0].mxu0
      %v706 = vadd.f32 0.0, %v705
      %v707 = vpop.f32.mrb[0].mxu0
      %v708 = vpop.f32.mrb[0].mxu0
      %v709 = vadd.f32 0.0, %v708
      %v710 = vpop.f32.mrb[0].mxu0
      %711 = vmatprep.mubr.bf16.mxu0 %v600
      %712 = vmatmul.mubr.bf16.gmra.mrb[0].mxu0 %v545
      %v713 = vpop.f32.mrb[0].mxu0
      %v714 = vadd.f32 0.0, %v713
      %v715 = vpop.f32.mrb[0].mxu0
      %v716 = vpop.f32.mrb[0].mxu0
      %v717 = vadd.f32 0.0, %v716
      %v718 = vpop.f32.mrb[0].mxu0
      %719 = vmatprep.mubr.bf16.mxu0 %v603
      %720 = vmatmul.mubr.bf16.gmra.mrb[0].mxu0 %v547
      %v721 = vpop.f32.mrb[0].mxu0
      %v722 = vadd.f32 0.0, %v721
      %v723 = vpop.f32.mrb[0].mxu0
      %v724 = vpop.f32.mrb[0].mxu0
      %v725 = vadd.f32 0.0, %v724
      %v726 = vpop.f32.mrb[0].mxu0
      %727 = vmatprep.mubr.bf16.mxu0 %v606
      %728 = vmatmul.mubr.bf16.gmra.mrb[0].mxu0 %v549
      %v729 = vpop.f32.mrb[0].mxu0
      %v730 = vadd.f32 0.0, %v729
      %v731 = vpop.f32.mrb[0].mxu0
      %v732 = vpop.f32.mrb[0].mxu0
      %v733 = vadd.f32 0.0, %v732
      %v734 = vpop.f32.mrb[0].mxu0
      %735 = vmatprep.mubr.bf16.mxu0 %v609
      %736 = vmatmul.mubr.bf16.gmra.mrb[0].mxu0 %v551
      %v737 = vpop.f32.mrb[0].mxu0
      %v738 = vadd.f32 0.0, %v737
      %v739 = vpop.f32.mrb[0].mxu0
      %v740 = vpop.f32.mrb[0].mxu0
      %v741 = vadd.f32 0.0, %v740
      %v742 = vpop.f32.mrb[0].mxu0
      %743 = vmatprep.mubr.bf16.mxu0 %v612
      %744 = vmatmul.mubr.bf16.gmra.mrb[0].mxu0 %v553
      %v745 = vpop.f32.mrb[0].mxu0
      %v746 = vadd.f32 0.0, %v745
      %v747 = vpop.f32.mrb[0].mxu0
      %v748 = vpop.f32.mrb[0].mxu0
      %v749 = vadd.f32 0.0, %v748
      %v750 = vpop.f32.mrb[0].mxu0
      %751 = vmatprep.mubr.bf16.mxu0 %v615
      %752 = vmatmul.mubr.bf16.gmra.mrb[0].mxu0 %v555
      %v753 = vpop.f32.mrb[0].mxu0
      %v754 = vadd.f32 0.0, %v753
      %v755 = vpop.f32.mrb[0].mxu0
      %v756 = vpop.f32.mrb[0].mxu0
      %v757 = vadd.f32 0.0, %v756
      %v758 = vpop.f32.mrb[0].mxu0
      %759 = vmatprep.mubr.bf16.mxu0 %v618
      %760 = vmatmul.mubr.bf16.gmra.mrb[0].mxu0 %v557
      %v761 = vpop.f32.mrb[0].mxu0
      %v762 = vadd.f32 0.0, %v761
      %v763 = vpop.f32.mrb[0].mxu0
      %v764 = vpop.f32.mrb[0].mxu0
      %v765 = vadd.f32 0.0, %v764
      %v766 = vpop.f32.mrb[0].mxu0
      %767 = vmatprep.mubr.bf16.mxu0 %v621
      %768 = vmatmul.mubr.bf16.gmra.mrb[0].mxu0 %v559
      %v769 = vpop.f32.mrb[0].mxu0
      %v770 = vadd.f32 0.0, %v769
      %v771 = vpop.f32.mrb[0].mxu0
      %v772 = vpop.f32.mrb[0].mxu0
      %v773 = vadd.f32 0.0, %v772
      %v774 = vpop.f32.mrb[0].mxu0
      %775 = vmatprep.mubr.bf16.mxu0 %v624
      %776 = vmatmul.mubr.bf16.gmra.mrb[0].mxu0 %v561
      %v777 = vpop.f32.mrb[0].mxu0
      %v778 = vadd.f32 0.0, %v777
      %v779 = vpop.f32.mrb[0].mxu0
      %v780 = vpop.f32.mrb[0].mxu0
      %v781 = vadd.f32 0.0, %v780
      %v782 = vpop.f32.mrb[0].mxu0
      %783 = vmatprep.mubr.bf16.mxu0 %v627
      %784 = vmatmul.mubr.bf16.gmra.mrb[0].mxu0 %v563
      %v785 = vpop.f32.mrb[0].mxu0
      %v786 = vadd.f32 0.0, %v785
      %v787 = vpop.f32.mrb[0].mxu0
      %v788 = vpop.f32.mrb[0].mxu0
      %v789 = vadd.f32 0.0, %v788
      %v790 = vpop.f32.mrb[0].mxu0
      %791 = vmatprep.mubr.bf16.mxu0 %v630
      %792 = vmatmul.mubr.bf16.gmra.mrb[0].mxu0 %v565
      %v793 = vpop.f32.mrb[0].mxu0
      %v794 = vadd.f32 0.0, %v793
      %v795 = vpop.f32.mrb[0].mxu0
      %v796 = vpop.f32.mrb[0].mxu0
      %v797 = vadd.f32 0.0, %v796
      %v798 = vpop.f32.mrb[0].mxu0
      %799 = vdwg.mxu0
      %v800 = vadd.f32 %v407, %v674
      %v801 = vadd.f32 %v408, %v677
      %v802 = vadd.f32 %v409, %v682
      %v803 = vadd.f32 %v410, %v685
      %v804 = vadd.f32 %v411, %v690
      %v805 = vadd.f32 %v412, %v693
      %v806 = vadd.f32 %v413, %v698
      %v807 = vadd.f32 %v414, %v701
      %v808 = vadd.f32 %v415, %v706
      %v809 = vadd.f32 %v416, %v709
      %v810 = vadd.f32 %v417, %v714
      %v811 = vadd.f32 %v418, %v717
      %v812 = vadd.f32 %v419, %v722
      %v813 = vadd.f32 %v420, %v725
      %v814 = vadd.f32 %v421, %v730
      %v815 = vadd.f32 %v422, %v733
      %v816 = vadd.f32 %v423, %v738
      %v817 = vadd.f32 %v424, %v741
      %v818 = vadd.f32 %v425, %v746
      %v819 = vadd.f32 %v426, %v749
      %v820 = vadd.f32 %v427, %v754
      %v821 = vadd.f32 %v428, %v757
      %v822 = vadd.f32 %v429, %v762
      %v823 = vadd.f32 %v430, %v765
      %v824 = vadd.f32 %v431, %v770
      %v825 = vadd.f32 %v432, %v773
      %v826 = vadd.f32 %v433, %v778
      %v827 = vadd.f32 %v434, %v781
      %v828 = vadd.f32 %v435, %v786
      %v829 = vadd.f32 %v436, %v789
      %v830 = vadd.f32 %v437, %v794
      %v831 = vadd.f32 %v438, %v797
      %vm832 = vcmask 523264
      %833 = vst.msk [vmem:[#allocation2] sm:$0xff] %vm832, %v800
      %834 = vst.msk [vmem:[#allocation2 + $0x8] sm:$0xff] %vm832, %v801
      %835 = vst.msk [vmem:[#allocation2 + $0x10] sm:$0xff] %vm832, %v802
      %836 = vst.msk [vmem:[#allocation2 + $0x18] sm:$0xff] %vm832, %v803
      %837 = vst.msk [vmem:[#allocation2 + $0x20] sm:$0xff] %vm832, %v804
      %838 = vst.msk [vmem:[#allocation2 + $0x28] sm:$0xff] %vm832, %v805
      %839 = vst.msk [vmem:[#allocation2 + $0x30] sm:$0xff] %vm832, %v806
      %840 = vst.msk [vmem:[#allocation2 + $0x38] sm:$0xff] %vm832, %v807
      %841 = vst.msk [vmem:[#allocation2 + $0x40] sm:$0xff] %vm832, %v808
      %842 = vst.msk [vmem:[#allocation2 + $0x48] sm:$0xff] %vm832, %v809
      %843 = vst.msk [vmem:[#allocation2 + $0x50] sm:$0xff] %vm832, %v810
      %844 = vst.msk [vmem:[#allocation2 + $0x58] sm:$0xff] %vm832, %v811
      %845 = vst.msk [vmem:[#allocation2 + $0x60] sm:$0xff] %vm832, %v812
      %846 = vst.msk [vmem:[#allocation2 + $0x68] sm:$0xff] %vm832, %v813
      %847 = vst.msk [vmem:[#allocation2 + $0x70] sm:$0xff] %vm832, %v814
      %848 = vst.msk [vmem:[#allocation2 + $0x78] sm:$0xff] %vm832, %v815
      %849 = vst.msk [vmem:[#allocation2 + $0x80] sm:$0xff] %vm832, %v816
      %850 = vst.msk [vmem:[#allocation2 + $0x88] sm:$0xff] %vm832, %v817
      %851 = vst.msk [vmem:[#allocation2 + $0x90] sm:$0xff] %vm832, %v818
      %852 = vst.msk [vmem:[#allocation2 + $0x98] sm:$0xff] %vm832, %v819
      %853 = vst.msk [vmem:[#allocation2 + $0xa0] sm:$0xff] %vm832, %v820
      %854 = vst.msk [vmem:[#allocation2 + $0xa8] sm:$0xff] %vm832, %v821
      %855 = vst.msk [vmem:[#allocation2 + $0xb0] sm:$0xff] %vm832, %v822
      %856 = vst.msk [vmem:[#allocation2 + $0xb8] sm:$0xff] %vm832, %v823
      %857 = vst.msk [vmem:[#allocation2 + $0xc0] sm:$0xff] %vm832, %v824
      %858 = vst.msk [vmem:[#allocation2 + $0xc8] sm:$0xff] %vm832, %v825
      %859 = vst.msk [vmem:[#allocation2 + $0xd0] sm:$0xff] %vm832, %v826
      %860 = vst.msk [vmem:[#allocation2 + $0xd8] sm:$0xff] %vm832, %v827
      %861 = vst.msk [vmem:[#allocation2 + $0xe0] sm:$0xff] %vm832, %v828
      %862 = vst.msk [vmem:[#allocation2 + $0xe8] sm:$0xff] %vm832, %v829
      %863 = vst.msk [vmem:[#allocation2 + $0xf0] sm:$0xff] %vm832, %v830
      %864 = vst.msk [vmem:[#allocation2 + $0xf8] sm:$0xff] %vm832, %v831
      // Predicated region
      $region41: #{_fused_mm.1} parent=35 // pred_check
        %p865 = pneg %p309
      $region42: #{_fused_mm.1} parent=35 // pred_check_branch
        %867 = sbr.rel (%p865) target = $region44
      $region43: #{_fused_mm.1} parent=35 // pred_region
        %v868 = vld [vmem:[#allocation2] sm:$0xff]
        %v869 = vld [vmem:[#allocation2 + $0x8] sm:$0xff]
        %v870 = vld [vmem:[#allocation2 + $0x10] sm:$0xff]
        %v871 = vld [vmem:[#allocation2 + $0x18] sm:$0xff]
        %v872 = vld [vmem:[#allocation2 + $0x20] sm:$0xff]
        %v873 = vld [vmem:[#allocation2 + $0x28] sm:$0xff]
        %v874 = vld [vmem:[#allocation2 + $0x30] sm:$0xff]
        %v875 = vld [vmem:[#allocation2 + $0x38] sm:$0xff]
        %v876 = vld [vmem:[#allocation2 + $0x40] sm:$0xff]
        %v877 = vld [vmem:[#allocation2 + $0x48] sm:$0xff]
        %v878 = vld [vmem:[#allocation2 + $0x50] sm:$0xff]
        %v879 = vld [vmem:[#allocation2 + $0x58] sm:$0xff]
        %v880 = vld [vmem:[#allocation2 + $0x60] sm:$0xff]
        %v881 = vld [vmem:[#allocation2 + $0x68] sm:$0xff]
        %v882 = vld [vmem:[#allocation2 + $0x70] sm:$0xff]
        %v883 = vld [vmem:[#allocation2 + $0x78] sm:$0xff]
        %v884 = vld [vmem:[#allocation2 + $0x80] sm:$0xff]
        %v885 = vld [vmem:[#allocation2 + $0x88] sm:$0xff]
        %v886 = vld [vmem:[#allocation2 + $0x90] sm:$0xff]
        %v887 = vld [vmem:[#allocation2 + $0x98] sm:$0xff]
        %v888 = vld [vmem:[#allocation2 + $0xa0] sm:$0xff]
        %v889 = vld [vmem:[#allocation2 + $0xa8] sm:$0xff]
        %v890 = vld [vmem:[#allocation2 + $0xb0] sm:$0xff]
        %v891 = vld [vmem:[#allocation2 + $0xb8] sm:$0xff]
        %v892 = vld [vmem:[#allocation2 + $0xc0] sm:$0xff]
        %v893 = vld [vmem:[#allocation2 + $0xc8] sm:$0xff]
        %v894 = vld [vmem:[#allocation2 + $0xd0] sm:$0xff]
        %v895 = vld [vmem:[#allocation2 + $0xd8] sm:$0xff]
        %v896 = vld [vmem:[#allocation2 + $0xe0] sm:$0xff]
        %v897 = vld [vmem:[#allocation2 + $0xe8] sm:$0xff]
        %v898 = vld [vmem:[#allocation2 + $0xf0] sm:$0xff]
        %v899 = vld [vmem:[#allocation2 + $0xf8] sm:$0xff]
        %v900 = vld [vmem:[%s295] sm:$0x1]
        %v902 = vlaneseq
        %v903 = vshrl.u32 %v902, 7
        %v904 = vsub.s32 0, %v903
        %v905 = vrot.slane %v900, %v904
        %v907 = vmul.f32 %v868, %v905
        %v908 = vmul.f32 %v869, %v905
        %v909 = vmul.f32 %v870, %v905
        %v910 = vmul.f32 %v871, %v905
        %v911 = vmul.f32 %v872, %v905
        %v912 = vmul.f32 %v873, %v905
        %v913 = vmul.f32 %v874, %v905
        %v914 = vmul.f32 %v875, %v905
        %v915 = vmul.f32 %v876, %v905
        %v916 = vmul.f32 %v877, %v905
        %v917 = vmul.f32 %v878, %v905
        %v918 = vmul.f32 %v879, %v905
        %v919 = vmul.f32 %v880, %v905
        %v920 = vmul.f32 %v881, %v905
        %v921 = vmul.f32 %v882, %v905
        %v922 = vmul.f32 %v883, %v905
        %v923 = vmul.f32 %v884, %v905
        %v924 = vmul.f32 %v885, %v905
        %v925 = vmul.f32 %v886, %v905
        %v926 = vmul.f32 %v887, %v905
        %v927 = vmul.f32 %v888, %v905
        %v928 = vmul.f32 %v889, %v905
        %v929 = vmul.f32 %v890, %v905
        %v930 = vmul.f32 %v891, %v905
        %v931 = vmul.f32 %v892, %v905
        %v932 = vmul.f32 %v893, %v905
        %v933 = vmul.f32 %v894, %v905
        %v934 = vmul.f32 %v895, %v905
        %v935 = vmul.f32 %v896, %v905
        %v936 = vmul.f32 %v897, %v905
        %v937 = vmul.f32 %v898, %v905
        %v938 = vmul.f32 %v899, %v905
        %v939 = vld [vmem:[%s298] sm:$0x1]
        %v941 = vlaneseq
        %v942 = vshrl.u32 %v941, 7
        %v943 = vsub.s32 0, %v942
        %v944 = vrot.slane %v939, %v943
        %v946 = vadd.f32 %v907, %v944
        %v947 = vadd.f32 %v908, %v944
        %v948 = vadd.f32 %v909, %v944
        %v949 = vadd.f32 %v910, %v944
        %v950 = vadd.f32 %v911, %v944
        %v951 = vadd.f32 %v912, %v944
        %v952 = vadd.f32 %v913, %v944
        %v953 = vadd.f32 %v914, %v944
        %v954 = vadd.f32 %v915, %v944
        %v955 = vadd.f32 %v916, %v944
        %v956 = vadd.f32 %v917, %v944
        %v957 = vadd.f32 %v918, %v944
        %v958 = vadd.f32 %v919, %v944
        %v959 = vadd.f32 %v920, %v944
        %v960 = vadd.f32 %v921, %v944
        %v961 = vadd.f32 %v922, %v944
        %v962 = vadd.f32 %v923, %v944
        %v963 = vadd.f32 %v924, %v944
        %v964 = vadd.f32 %v925, %v944
        %v965 = vadd.f32 %v926, %v944
        %v966 = vadd.f32 %v927, %v944
        %v967 = vadd.f32 %v928, %v944
        %v968 = vadd.f32 %v929, %v944
        %v969 = vadd.f32 %v930, %v944
        %v970 = vadd.f32 %v931, %v944
        %v971 = vadd.f32 %v932, %v944
        %v972 = vadd.f32 %v933, %v944
        %v973 = vadd.f32 %v934, %v944
        %v974 = vadd.f32 %v935, %v944
        %v975 = vadd.f32 %v936, %v944
        %v976 = vadd.f32 %v937, %v944
        %v977 = vadd.f32 %v938, %v944
        %v978 = vmax.f32 %v946, 0.0
        %v979 = vmax.f32 %v947, 0.0
        %v980 = vmax.f32 %v948, 0.0
        %v981 = vmax.f32 %v949, 0.0
        %v982 = vmax.f32 %v950, 0.0
        %v983 = vmax.f32 %v951, 0.0
        %v984 = vmax.f32 %v952, 0.0
        %v985 = vmax.f32 %v953, 0.0
        %v986 = vmax.f32 %v954, 0.0
        %v987 = vmax.f32 %v955, 0.0
        %v988 = vmax.f32 %v956, 0.0
        %v989 = vmax.f32 %v957, 0.0
        %v990 = vmax.f32 %v958, 0.0
        %v991 = vmax.f32 %v959, 0.0
        %v992 = vmax.f32 %v960, 0.0
        %v993 = vmax.f32 %v961, 0.0
        %v994 = vmax.f32 %v962, 0.0
        %v995 = vmax.f32 %v963, 0.0
        %v996 = vmax.f32 %v964, 0.0
        %v997 = vmax.f32 %v965, 0.0
        %v998 = vmax.f32 %v966, 0.0
        %v999 = vmax.f32 %v967, 0.0
        %v1000 = vmax.f32 %v968, 0.0
        %v1001 = vmax.f32 %v969, 0.0
        %v1002 = vmax.f32 %v970, 0.0
        %v1003 = vmax.f32 %v971, 0.0
        %v1004 = vmax.f32 %v972, 0.0
        %v1005 = vmax.f32 %v973, 0.0
        %v1006 = vmax.f32 %v974, 0.0
        %v1007 = vmax.f32 %v975, 0.0
        %v1008 = vmax.f32 %v976, 0.0
        %v1009 = vmax.f32 %v977, 0.0
        %1010 = vst.msk [vmem:[%s306] sm:$0xff] %vm832, %v978
        %1011 = vst.msk [vmem:[%s306 + $0x8] sm:$0xff] %vm832, %v979
        %1012 = vst.msk [vmem:[%s306 + $0x10] sm:$0xff] %vm832, %v980
        %1013 = vst.msk [vmem:[%s306 + $0x18] sm:$0xff] %vm832, %v981
        %1014 = vst.msk [vmem:[%s306 + $0x20] sm:$0xff] %vm832, %v982
        %1015 = vst.msk [vmem:[%s306 + $0x28] sm:$0xff] %vm832, %v983
        %1016 = vst.msk [vmem:[%s306 + $0x30] sm:$0xff] %vm832, %v984
        %1017 = vst.msk [vmem:[%s306 + $0x38] sm:$0xff] %vm832, %v985
        %1018 = vst.msk [vmem:[%s306 + $0x40] sm:$0xff] %vm832, %v986
        %1019 = vst.msk [vmem:[%s306 + $0x48] sm:$0xff] %vm832, %v987
        %1020 = vst.msk [vmem:[%s306 + $0x50] sm:$0xff] %vm832, %v988
        %1021 = vst.msk [vmem:[%s306 + $0x58] sm:$0xff] %vm832, %v989
        %1022 = vst.msk [vmem:[%s306 + $0x60] sm:$0xff] %vm832, %v990
        %1023 = vst.msk [vmem:[%s306 + $0x68] sm:$0xff] %vm832, %v991
        %1024 = vst.msk [vmem:[%s306 + $0x70] sm:$0xff] %vm832, %v992
        %1025 = vst.msk [vmem:[%s306 + $0x78] sm:$0xff] %vm832, %v993
        %1026 = vst.msk [vmem:[%s306 + $0x80] sm:$0xff] %vm832, %v994
        %1027 = vst.msk [vmem:[%s306 + $0x88] sm:$0xff] %vm832, %v995
        %1028 = vst.msk [vmem:[%s306 + $0x90] sm:$0xff] %vm832, %v996
        %1029 = vst.msk [vmem:[%s306 + $0x98] sm:$0xff] %vm832, %v997
        %1030 = vst.msk [vmem:[%s306 + $0xa0] sm:$0xff] %vm832, %v998
        %1031 = vst.msk [vmem:[%s306 + $0xa8] sm:$0xff] %vm832, %v999
        %1032 = vst.msk [vmem:[%s306 + $0xb0] sm:$0xff] %vm832, %v1000
        %1033 = vst.msk [vmem:[%s306 + $0xb8] sm:$0xff] %vm832, %v1001
        %1034 = vst.msk [vmem:[%s306 + $0xc0] sm:$0xff] %vm832, %v1002
        %1035 = vst.msk [vmem:[%s306 + $0xc8] sm:$0xff] %vm832, %v1003
        %1036 = vst.msk [vmem:[%s306 + $0xd0] sm:$0xff] %vm832, %v1004
        %1037 = vst.msk [vmem:[%s306 + $0xd8] sm:$0xff] %vm832, %v1005
        %1038 = vst.msk [vmem:[%s306 + $0xe0] sm:$0xff] %vm832, %v1006
        %1039 = vst.msk [vmem:[%s306 + $0xe8] sm:$0xff] %vm832, %v1007
        %1040 = vst.msk [vmem:[%s306 + $0xf0] sm:$0xff] %vm832, %v1008
        %1041 = vst.msk [vmem:[%s306 + $0xf8] sm:$0xff] %vm832, %v1009
      $region44: #{_fused_mm.1} parent=35 // pred_fallthru
        _
      %s1042 = smul.u32 32, %s20
      %p1043 = scmp.lt.s32.totalorder %s1042, 63
      %s1044 = scalar_select %p1043, %s1042, 63
      %p1045 = scmp.lt.s32.totalorder %s21, 0
      %s1046 = scalar_select %p1045, %s21, 0
      %s1047 = sadd.s32 %s1046, %s1044
      %s1048 = smul.addr %s1047, 8
      %s1049 = scalar_lea.vmem %s4, %s1048
      // Predicated region
      $region45: #{_fused_mm.1} parent=35 // pred_check
        %p1050 = pneg %p162
      $region46: #{_fused_mm.1} parent=35 // pred_check_branch
        %1052 = sbr.rel (%p1050) target = $region48
      $region47: #{_fused_mm.1} parent=35 // pred_region
        %s1053 = smul.u32 32, %s20
      $region48: #{_fused_mm.1} parent=35 // pred_fallthru
        _
    $region36: #{_fused_mm.1} parent=5 // pred_fallthru
      _
    %p1054 = scmp.le.s32.totalorder 2, %s10
    // Predicated region
    $region49: #{_fused_mm.1} parent=5 // pred_check
      %p1055 = pneg %p1054
    $region50: #{_fused_mm.1} parent=5 // pred_check_branch
      %1057 = sbr.rel (%p1055) target = $region52
    $region51: #{_fused_mm.1} parent=5 // pred_region
      %s1058 = ssub.s32 %s10, 2
      // Predicated region
      $region53: #{_fused_mm.1} parent=51 // pred_check
        %p1059 = pneg %p168
      $region54: #{_fused_mm.1} parent=51 // pred_check_branch
        %1061 = sbr.rel (%p1059) target = $region56
      $region55: #{_fused_mm.1} parent=51 // pred_region
        %s1062 = smul.u32 32, %s23
        %p1063 = scmp.lt.s32.totalorder %s1062, 63
        %s1064 = scalar_select %p1063, %s1062, 63
        %p1065 = scmp.lt.s32.totalorder %s24, 0
        %s1066 = scalar_select %p1065, %s24, 0
        %s1067 = sadd.s32 %s1066, %s1064
        %s1068 = smul.addr %s1067, 8
        %s1069 = scalar_lea.vmem %s4, %s1068
      $region56: #{_fused_mm.1} parent=51 // pred_fallthru
        _
    $region52: #{_fused_mm.1} parent=5 // pred_fallthru
      _
  $region6: #{_fused_mm.1} parent=0 // loop_footer
    %s14 = sadd.s32 1, %s10
  $region7: #{_fused_mm.1} parent=0 // loop_footer_branch
    %9 = sbr.rel target = $region3
  $region8: #{_fused_mm.1} parent=0 // loop_exit
    _

</llo_original>
